<compile_context>
chip_gen: v5e
topology: v5e:2x2
jax: 0.10.0
libtpu: 0.0.40
codegen_flags: <defaults>
</compile_context>

<pallas_src>
import jax
import jax.numpy as jnp
from jax.experimental import pallas as pl
from jax.experimental.pallas import tpu as pltpu


def _round_up(x: int, m: int) -> int:
    return ((x + m - 1) // m) * m


# ----- Pallas kernel: one output tile = X_tile (TM, H) @ W_tile (H, TN) ------
def _lm_head_kernel(x_ref, w_ref, o_ref):
    o_ref[...] = jnp.dot(
        x_ref[...], w_ref[...], preferred_element_type=jnp.float32
    ).astype(o_ref.dtype)


def _make_lm_head_call(m_pad, h, v_pad, tm, tn, stream_dtype):
    grid = (m_pad // tm, v_pad // tn)

    in_bytes = jnp.dtype(stream_dtype).itemsize
    # double-buffered X, W and output blocks + slack
    vmem_needed = 2 * (tm * h * in_bytes + h * tn * in_bytes + tm * tn * 4) + (2 << 20)
    vmem_limit = int(min(max(vmem_needed, 32 << 20), 100 << 20))

    return pl.pallas_call(
        _lm_head_kernel,
        out_shape=jax.ShapeDtypeStruct((m_pad, v_pad), jnp.float32),
        grid_spec=pltpu.PrefetchScalarGridSpec(
            num_scalar_prefetch=0,
            grid=grid,
            in_specs=[
                # activations: full hidden, resident across the inner vocab axis
                pl.BlockSpec((tm, h), lambda i, j: (i, 0)),
                # weights: streamed (double-buffered) H x TN tile per vocab step
                pl.BlockSpec((h, tn), lambda i, j: (0, j)),
            ],
            out_specs=pl.BlockSpec((tm, tn), lambda i, j: (i, j)),
        ),
        compiler_params=pltpu.CompilerParams(
            dimension_semantics=("parallel", "parallel"),
            vmem_limit_bytes=vmem_limit,
        ),
    )


# ----- forward matching the PyTorch wrapper semantics -------------------------
def lm_head_forward(hidden_states, w_lm, *, tm=256, tn=512,
                    stream_dtype=jnp.bfloat16):
    """logits = hidden_states @ w_lm  (bias-free Falcon LM head shard).

    hidden_states: (B, S, H)
    w_lm:          (H, V)
    returns:       (B, S, V) float32 logits
    """
    hs = jnp.asarray(hidden_states)
    b, s, h = hs.shape
    hw, v = w_lm.shape
    assert h == hw, "hidden size mismatch"

    m = b * s
    x2d = hs.reshape(m, h)

    # M tile: clamp to the (sublane-padded) row count for decode-sized inputs.
    tm_eff = _round_up(min(tm, _round_up(m, 8)), 8)
    m_pad = _round_up(m, tm_eff)

    # Vocab tile: lane-dense (multiple of 128); pad V to the tile.
    tn_eff = _round_up(min(tn, _round_up(v, 128)), 128)
    v_pad = _round_up(v, tn_eff)

    if m_pad != m:
        x2d = jnp.pad(x2d, ((0, m_pad - m), (0, 0)))
    w2d = w_lm if v_pad == v else jnp.pad(w_lm, ((0, 0), (0, v_pad - v)))

    # bf16 streaming by default; accumulation stays f32 inside the kernel.
    x_in = x2d.astype(stream_dtype)
    w_in = w2d.astype(stream_dtype)

    logits = _make_lm_head_call(m_pad, h, v_pad, tm_eff, tn_eff, stream_dtype)(
        x_in, w_in)
    return logits[:m, :v].reshape(b, s, v)


if __name__ == "__main__":
    # Small shapes consistent with the module (decode-like): V deliberately
    # NOT a multiple of the vocab tile to exercise the padded-tail path.
    B, S, H, V = 2, 8, 256, 1000

    key = jax.random.PRNGKey(0)
    k_w, k_x = jax.random.split(key)
    w_lm = 0.02 * jax.random.normal(k_w, (H, V), jnp.float32)
    hidden_states = jax.random.normal(k_x, (B, S, H), jnp.float32)

    logits = lm_head_forward(hidden_states, w_lm)
    jax.block_until_ready(logits)

    assert logits.shape == (B, S, V) and logits.dtype == jnp.float32
    assert bool(jnp.all(jnp.isfinite(logits)))

    # Reference with the same bf16 operand quantization (f32 accumulate).
    x_q = hidden_states.reshape(-1, H).astype(jnp.bfloat16).astype(jnp.float32)
    w_q = w_lm.astype(jnp.bfloat16).astype(jnp.float32)
    ref_q = (x_q @ w_q).reshape(B, S, V)
    assert bool(jnp.allclose(logits, ref_q, atol=1e-2, rtol=1e-2))

    # Loose check against the full-f32 reference (bf16 streaming error bound).
    ref_f32 = (hidden_states.reshape(-1, H) @ w_lm).reshape(B, S, V)
    assert bool(jnp.allclose(logits, ref_f32, atol=5e-2, rtol=5e-2))

    print("KERNEL_OK")
</pallas_src>

<mosaic_0001>
module attributes {stable_mosaic.version = 11 : i64} {
  func.func @_lm_head_kernel(%arg0: i32, %arg1: i32, %arg2: memref<16x256xbf16, #tpu.memory_space<vmem>>, %arg3: memref<256x512xbf16, #tpu.memory_space<vmem>>, %arg4: memref<16x512xf32, #tpu.memory_space<vmem>>) attributes {dimension_semantics = [#tpu.dimension_semantics<parallel>, #tpu.dimension_semantics<parallel>], iteration_bounds = array<i64: 1, 2>, scalar_prefetch = 0 : i64, scratch_operands = 0 : i64, tpu.core_type = #tpu.core_type<tc>, window_params = [{transform_indices = @transform_0, window_bounds = array<i64: 16, 256>}, {transform_indices = @transform_1, window_bounds = array<i64: 256, 512>}, {transform_indices = @transform_2, window_bounds = array<i64: 16, 512>}]} {
    %c0 = arith.constant 0 : index
    %c0_0 = arith.constant 0 : index
    %0 = vector.load %arg2[%c0, %c0_0] : memref<16x256xbf16, #tpu.memory_space<vmem>>, vector<16x256xbf16>
    %c0_1 = arith.constant 0 : index
    %c0_2 = arith.constant 0 : index
    %1 = vector.load %arg3[%c0_1, %c0_2] : memref<256x512xbf16, #tpu.memory_space<vmem>>, vector<256x512xbf16>
    %cst = arith.constant dense<0.000000e+00> : vector<16x512xf32>
    %2 = tpu.matmul %0, %1, %cst {dimension_numbers = #tpu.dot_dimension_numbers<[1], [0], [0], [1], [0, 0, 1, 1], [], []>} : vector<16x256xbf16>, vector<256x512xbf16>, vector<16x512xf32> -> vector<16x512xf32>
    %c0_3 = arith.constant 0 : index
    %c0_4 = arith.constant 0 : index
    %3 = vector.load %arg4[%c0_3, %c0_4] : memref<16x512xf32, #tpu.memory_space<vmem>>, vector<16x512xf32>
    tpu.vector_store %arg4[%c0_3, %c0_4], %2 {strides = array<i32>} : memref<16x512xf32, #tpu.memory_space<vmem>>, vector<16x512xf32>,
    return
  }
  func.func @transform_0(%arg0: i32, %arg1: i32) -> (i32, i32) {
    %c0_i32 = arith.constant 0 : i32
    %c0_i32_0 = arith.constant 0 : i32
    return %arg0, %c0_i32 : i32, i32
  }
  func.func @transform_1(%arg0: i32, %arg1: i32) -> (i32, i32) {
    %c0_i32 = arith.constant 0 : i32
    %c0_i32_0 = arith.constant 0 : i32
    return %c0_i32, %arg1 : i32, i32
  }
  func.func @transform_2(%arg0: i32, %arg1: i32) -> (i32, i32) {
    %c0_i32 = arith.constant 0 : i32
    return %arg0, %arg1 : i32, i32
  }
}

</mosaic_0001>

<llo_original>
// kernel: tpu_custom_call.1
$region0: #{tpu_custom_call.1}
  #allocation0 [shape = 'u32[]', space=smem, size = 0x4, offset = 0x4, fixed_abs, tag = 'smem constant byte address 0x4 - core index']
  #allocation1 [shape = 'u32[72,128]{1,0:T(1,128)}', space=vmem, size = 0x9000, scoped, tag = 'internal scratch']
  %s0 = inlined_call_operand.hbm [shape: bf16[16,256], index: 0, kind: input, shape index: {}]
  %s1 = inlined_call_operand.hbm [shape: bf16[256,1024], index: 1, kind: input, shape index: {}]
  %s2 = inlined_call_operand.hbm [shape: f32[16,1024], index: 2, kind: output, shape index: {}]
  %s3 = sld [smem:[#allocation0]]
  $region49: #{tpu_custom_call.1} parent=0
    _
  %s5 = ssub.s32 1, %s3
  %s6 = scalar_select 0, %s5, %s3
  $region1: #{tpu_custom_call.1} parent=0
    #allocation2 [shape = 'u8[8192]{0}', space=vmem, size = 0x2000, scoped, tag = 'input window, operand 0, single buffered']
    #allocation3 [shape = 's32[2]{0}', space=sflag, size = 0x8, scoped, tag = 'scoped memory for tpu_custom_call.1']
    #allocation4 [shape = 's32[2]{0}', space=sflag, size = 0x8, scoped, tag = 'scoped memory for tpu_custom_call.1']
    #allocation5 [shape = 'u8[524288]{0}', space=vmem, size = 0x80000, scoped, tag = 'input window, operand 1']
    #allocation6 [shape = 's32[2]{0}', space=sflag, size = 0x8, scoped, tag = 'scoped memory for tpu_custom_call.1']
    #allocation7 [shape = 'u8[65536]{0}', space=vmem, size = 0x10000, scoped, tag = 'output window, operand 0']
    %7 = vsyncpa [#allocation3], 0
    %8 = vsyncpa [#allocation6], 0
    %s9 = scalar_lea.sflag [#allocation6], 1
    %10 = vsyncpa %s9, 0
    %11 = vsyncpa [#allocation4], 0
    %s12 = scalar_lea.sflag [#allocation4], 1
    %13 = vsyncpa %s12, 0
    loop: start=0, step=1, limit=4
    $region2: #{tpu_custom_call.1} parent=1 // loop_pre_header
      _
    $region3: #{tpu_custom_call.1} parent=1 // loop_header
      %s15 = sphi 0, %s19
      %p16 = scmp.ge.s32.totalorder %s15, 4
      %s22 = sphi 0, %s34
      %s23 = sphi 0, %s30
      %s24 = sphi 0, %s22
      %s25 = sphi 0, %s23
      %s26 = sphi 0, %s24
      %s27 = sphi 0, %s25
      %s37 = sphi 0, %s39
      %s40 = sphi 0, %s37
      %s41 = sphi 0, %s40
      %s57 = sphi 0, %s41
      %s63 = sphi 0, %s65
      %s66 = sphi 0, %s63
      %s67 = sphi 0, %s66
      %s83 = sphi 0, %s67
      %s91 = sphi 0, %s93
      %s94 = sphi 0, %s91
      %s95 = sphi 0, %s94
      %s111 = sphi 0, %s95
    $region4: #{tpu_custom_call.1} parent=1 // loop_header_branch
      %18 = sbr.rel (%p16) target = $region8
    $region5: #{tpu_custom_call.1} parent=1 // loop_body
      %s20 = ssub.s32 %s15, 1
      %s21 = ssub.s32 %s15, 2
      %s28 = sadd.s32 1, %s23
      %p29 = scmp.ge.s32.totalorder %s28, 2
      %s30 = scalar_select %p29, 0, %s28
      %s31 = sadd.s32 1, %s22
      %s32 = scalar_select %p29, %s31, %s22
      %p33 = scmp.ge.s32.totalorder %s32, 1
      %s34 = scalar_select %p33, 0, %s32
      %s35 = ssub.s32 %s22, %s34
      %p36 = scmp.eq.s32.totalorder %s35, 0
      %s38 = sadd.s32 %s37, 1
      %s39 = scalar_select %p36, %s37, %s38
      %p42 = pneg %p36
      %p43 = scmp.eq.s32.totalorder %s15, 1
      %p44 = por %p42, %p43
      %p45 = scmp.ne.s32.totalorder %s37, %s40
      %p46 = scmp.eq.s32.totalorder %s15, 0
      %p47 = por %p45, %p46
      %p48 = scmp.ne.s32.totalorder %s37, %s40
      %p49 = scmp.eq.s32.totalorder %s20, 1
      %p50 = por %p48, %p49
      %p51 = scmp.ne.s32.totalorder %s40, %s41
      %p52 = scmp.eq.s32.totalorder %s20, 0
      %p53 = por %p51, %p52
      %p54 = scmp.ne.s32.totalorder %s40, %s41
      %p55 = scmp.eq.s32.totalorder %s21, 1
      %p56 = por %p54, %p55
      %p58 = scmp.ne.s32.totalorder %s41, %s57
      %p59 = scmp.eq.s32.totalorder %s21, 0
      %p60 = por %p58, %p59
      %s61 = ssub.s32 %s23, %s30
      %p62 = scmp.eq.s32.totalorder %s61, 0
      %s64 = sadd.s32 %s63, 1
      %s65 = scalar_select %p62, %s63, %s64
      %p68 = pneg %p62
      %p69 = scmp.eq.s32.totalorder %s15, 1
      %p70 = por %p68, %p69
      %p71 = scmp.ne.s32.totalorder %s63, %s66
      %p72 = scmp.eq.s32.totalorder %s15, 0
      %p73 = por %p71, %p72
      %p74 = scmp.ne.s32.totalorder %s63, %s66
      %p75 = scmp.eq.s32.totalorder %s20, 1
      %p76 = por %p74, %p75
      %p77 = scmp.ne.s32.totalorder %s66, %s67
      %p78 = scmp.eq.s32.totalorder %s20, 0
      %p79 = por %p77, %p78
      %p80 = scmp.ne.s32.totalorder %s66, %s67
      %p81 = scmp.eq.s32.totalorder %s21, 1
      %p82 = por %p80, %p81
      %p84 = scmp.ne.s32.totalorder %s67, %s83
      %p85 = scmp.eq.s32.totalorder %s21, 0
      %p86 = por %p84, %p85
      %s87 = ssub.s32 %s22, %s34
      %s88 = ssub.s32 %s23, %s30
      %s89 = sor.u32 %s87, %s88
      %p90 = scmp.eq.s32.totalorder %s89, 0
      %s92 = sadd.s32 %s91, 1
      %s93 = scalar_select %p90, %s91, %s92
      %p96 = pneg %p90
      %p97 = scmp.eq.s32.totalorder %s15, 1
      %p98 = por %p96, %p97
      %p99 = scmp.ne.s32.totalorder %s91, %s94
      %p100 = scmp.eq.s32.totalorder %s15, 0
      %p101 = por %p99, %p100
      %p102 = scmp.ne.s32.totalorder %s91, %s94
      %p103 = scmp.eq.s32.totalorder %s20, 1
      %p104 = por %p102, %p103
      %p105 = scmp.ne.s32.totalorder %s94, %s95
      %p106 = scmp.eq.s32.totalorder %s20, 0
      %p107 = por %p105, %p106
      %p108 = scmp.ne.s32.totalorder %s94, %s95
      %p109 = scmp.eq.s32.totalorder %s21, 1
      %p110 = por %p108, %p109
      %p112 = scmp.ne.s32.totalorder %s95, %s111
      %p113 = scmp.eq.s32.totalorder %s21, 0
      %p114 = por %p112, %p113
      %p115 = scmp.le.s32.totalorder 1, %s15
      %p116 = scmp.lt.s32.totalorder %s15, 3
      %p117 = pnand %p115, %p116
      %p118 = pneg %p117
      // Predicated region
      $region9: #{tpu_custom_call.1} parent=5 // pred_check
        _
      $region10: #{tpu_custom_call.1} parent=5 // pred_check_branch
        %120 = sbr.rel (%p117) target = $region12
      $region11: #{tpu_custom_call.1} parent=5 // pred_region
        %s121 = ssub.s32 %s15, 1
        // Predicated region
        $region13: #{tpu_custom_call.1} parent=11 // pred_check
          %p122 = pneg %p53
        $region14: #{tpu_custom_call.1} parent=11 // pred_check_branch
          %124 = sbr.rel (%p122) target = $region16
        $region15: #{tpu_custom_call.1} parent=11 // pred_region
          %s125 = smul.u32 2, %s24
          %127 = vsyncadd [#allocation3], 0
          %s128 = smul.addr %s125, 2
          %s129 = smul.addr %s128, 4
          %s130 = scalar_lea.hbm %s0, %s129
          %s131 = sshll.u32 %s130, 4
          %s132 = int_to_ptr.hbm [resolvable:$true] %s131
          %s133 = sshll.u32 [#allocation2], 4
          %s134 = int_to_ptr.vmem [resolvable:$true] %s133
          %139 = dma.hbm_to_vmem [thread:$0]  %s132, 256, %s134, [#allocation3], 128, 128, 8
        $region16: #{tpu_custom_call.1} parent=11 // pred_fallthru
          _
      $region12: #{tpu_custom_call.1} parent=5 // pred_fallthru
        _
      %p140 = scmp.lt.s32.totalorder %s15, 2
      // Predicated region
      $region17: #{tpu_custom_call.1} parent=5 // pred_check
        %p141 = pneg %p140
      $region18: #{tpu_custom_call.1} parent=5 // pred_check_branch
        %143 = sbr.rel (%p141) target = $region20
      $region19: #{tpu_custom_call.1} parent=5 // pred_region
        // Predicated region
        $region21: #{tpu_custom_call.1} parent=19 // pred_check
          %p144 = pneg %p73
        $region22: #{tpu_custom_call.1} parent=19 // pred_check_branch
          %146 = sbr.rel (%p144) target = $region24
        $region23: #{tpu_custom_call.1} parent=19 // pred_region
          %s147 = sand.u32 %s63, 1
          %s148 = scalar_lea.sflag [#allocation6], %s147
          %s149 = sand.u32 %s63, 1
          %s150 = smul.addr %s149, 512
          %s151 = scalar_lea.vmem [#allocation5], %s150
          %s152 = smul.u32 4, %s23
          %154 = vsyncadd %s148, 0
          %s155 = smul.addr %s152, 4
          %s156 = scalar_lea.hbm %s1, %s155
          %s157 = sshll.u32 %s156, 4
          %s158 = int_to_ptr.hbm [resolvable:$true] %s157
          %s159 = sshll.u32 %s151, 4
          %s160 = int_to_ptr.vmem [resolvable:$true] %s159
          %165 = dma.hbm_to_vmem [thread:$0]  %s158, 8192, %s160, %s148, 512, 256, 16
        $region24: #{tpu_custom_call.1} parent=19 // pred_fallthru
          _
      $region20: #{tpu_custom_call.1} parent=5 // pred_fallthru
        _
      %p166 = scmp.le.s32.totalorder 1, %s15
      %p167 = scmp.lt.s32.totalorder %s15, 3
      %p168 = pnand %p166, %p167
      %p169 = pneg %p168
      // Predicated region
      $region25: #{tpu_custom_call.1} parent=5 // pred_check
        _
      $region26: #{tpu_custom_call.1} parent=5 // pred_check_branch
        %171 = sbr.rel (%p168) target = $region28
      $region27: #{tpu_custom_call.1} parent=5 // pred_region
        %s172 = ssub.s32 %s15, 1
        // Predicated region
        $region29: #{tpu_custom_call.1} parent=27 // pred_check
          %p173 = pneg %p53
        $region30: #{tpu_custom_call.1} parent=27 // pred_check_branch
          %175 = sbr.rel (%p173) target = $region32
        $region31: #{tpu_custom_call.1} parent=27 // pred_region
          %177 = dma.done [#allocation3], 256
        $region32: #{tpu_custom_call.1} parent=27 // pred_fallthru
          _
        %s178 = sand.u32 %s66, 1
        %s179 = scalar_lea.sflag [#allocation6], %s178
        %s180 = sand.u32 %s66, 1
        %s181 = smul.addr %s180, 512
        %s182 = scalar_lea.vmem [#allocation5], %s181
        // Predicated region
        $region33: #{tpu_custom_call.1} parent=27 // pred_check
          %p183 = pneg %p79
        $region34: #{tpu_custom_call.1} parent=27 // pred_check_branch
          %185 = sbr.rel (%p183) target = $region36
        $region35: #{tpu_custom_call.1} parent=27 // pred_region
          %187 = dma.done %s179, 8192
        $region36: #{tpu_custom_call.1} parent=27 // pred_fallthru
          _
        %p188 = pneg %p53
        %p189 = pneg %p50
        %s190 = sand.u32 %s66, 1
        %s191 = scalar_lea.sflag [#allocation6], %s190
        %s192 = sand.u32 %s66, 1
        %s193 = smul.addr %s192, 512
        %s194 = scalar_lea.vmem [#allocation5], %s193
        %p195 = pneg %p79
        %p196 = pneg %p76
        %p197 = pneg %p107
        %p198 = pneg %p104
        %s199 = sand.u32 %s94, 1
        %s200 = scalar_lea.sflag [#allocation4], %s199
        %s201 = sand.u32 %s94, 1
        %s202 = smul.addr %s201, 64
        %s203 = scalar_lea.vmem [#allocation7], %s202
        %s204 = smul.u32 2, %s24
        %s205 = smul.u32 4, %s25
        %s206 = smul.u32 2, %s24
        %s207 = smul.u32 4, %s25
        %v208 = vld [vmem:[#allocation2] sm:$0xff]
        %v209 = vld [vmem:[#allocation2 + $0x8] sm:$0xff]
        %v210 = vld [vmem:[%s182] sm:$0xff]
        %v211 = vld [vmem:[%s182 + $0x8] sm:$0xff]
        %v212 = vld [vmem:[%s182 + $0x10] sm:$0xff]
        %v213 = vld [vmem:[%s182 + $0x18] sm:$0xff]
        %v214 = vld [vmem:[%s182 + $0x20] sm:$0xff]
        %v215 = vld [vmem:[%s182 + $0x28] sm:$0xff]
        %v216 = vld [vmem:[%s182 + $0x30] sm:$0xff]
        %v217 = vld [vmem:[%s182 + $0x38] sm:$0xff]
        %v218 = vld [vmem:[%s182 + $0x40] sm:$0xff]
        %v219 = vld [vmem:[%s182 + $0x48] sm:$0xff]
        %v220 = vld [vmem:[%s182 + $0x50] sm:$0xff]
        %v221 = vld [vmem:[%s182 + $0x58] sm:$0xff]
        %v222 = vld [vmem:[%s182 + $0x60] sm:$0xff]
        %v223 = vld [vmem:[%s182 + $0x68] sm:$0xff]
        %v224 = vld [vmem:[%s182 + $0x70] sm:$0xff]
        %v225 = vld [vmem:[%s182 + $0x78] sm:$0xff]
        %v226 = vld [vmem:[%s182 + $0x80] sm:$0xff]
        %v227 = vld [vmem:[%s182 + $0x88] sm:$0xff]
        %v228 = vld [vmem:[%s182 + $0x90] sm:$0xff]
        %v229 = vld [vmem:[%s182 + $0x98] sm:$0xff]
        %v230 = vld [vmem:[%s182 + $0xa0] sm:$0xff]
        %v231 = vld [vmem:[%s182 + $0xa8] sm:$0xff]
        %v232 = vld [vmem:[%s182 + $0xb0] sm:$0xff]
        %v233 = vld [vmem:[%s182 + $0xb8] sm:$0xff]
        %v234 = vld [vmem:[%s182 + $0xc0] sm:$0xff]
        %v235 = vld [vmem:[%s182 + $0xc8] sm:$0xff]
        %v236 = vld [vmem:[%s182 + $0xd0] sm:$0xff]
        %v237 = vld [vmem:[%s182 + $0xd8] sm:$0xff]
        %v238 = vld [vmem:[%s182 + $0xe0] sm:$0xff]
        %v239 = vld [vmem:[%s182 + $0xe8] sm:$0xff]
        %v240 = vld [vmem:[%s182 + $0xf0] sm:$0xff]
        %v241 = vld [vmem:[%s182 + $0xf8] sm:$0xff]
        %v242 = vld [vmem:[%s182 + $0x100] sm:$0xff]
        %v243 = vld [vmem:[%s182 + $0x108] sm:$0xff]
        %v244 = vld [vmem:[%s182 + $0x110] sm:$0xff]
        %v245 = vld [vmem:[%s182 + $0x118] sm:$0xff]
        %v246 = vld [vmem:[%s182 + $0x120] sm:$0xff]
        %v247 = vld [vmem:[%s182 + $0x128] sm:$0xff]
        %v248 = vld [vmem:[%s182 + $0x130] sm:$0xff]
        %v249 = vld [vmem:[%s182 + $0x138] sm:$0xff]
        %v250 = vld [vmem:[%s182 + $0x140] sm:$0xff]
        %v251 = vld [vmem:[%s182 + $0x148] sm:$0xff]
        %v252 = vld [vmem:[%s182 + $0x150] sm:$0xff]
        %v253 = vld [vmem:[%s182 + $0x158] sm:$0xff]
        %v254 = vld [vmem:[%s182 + $0x160] sm:$0xff]
        %v255 = vld [vmem:[%s182 + $0x168] sm:$0xff]
        %v256 = vld [vmem:[%s182 + $0x170] sm:$0xff]
        %v257 = vld [vmem:[%s182 + $0x178] sm:$0xff]
        %v258 = vld [vmem:[%s182 + $0x180] sm:$0xff]
        %v259 = vld [vmem:[%s182 + $0x188] sm:$0xff]
        %v260 = vld [vmem:[%s182 + $0x190] sm:$0xff]
        %v261 = vld [vmem:[%s182 + $0x198] sm:$0xff]
        %v262 = vld [vmem:[%s182 + $0x1a0] sm:$0xff]
        %v263 = vld [vmem:[%s182 + $0x1a8] sm:$0xff]
        %v264 = vld [vmem:[%s182 + $0x1b0] sm:$0xff]
        %v265 = vld [vmem:[%s182 + $0x1b8] sm:$0xff]
        %v266 = vld [vmem:[%s182 + $0x1c0] sm:$0xff]
        %v267 = vld [vmem:[%s182 + $0x1c8] sm:$0xff]
        %v268 = vld [vmem:[%s182 + $0x1d0] sm:$0xff]
        %v269 = vld [vmem:[%s182 + $0x1d8] sm:$0xff]
        %v270 = vld [vmem:[%s182 + $0x1e0] sm:$0xff]
        %v271 = vld [vmem:[%s182 + $0x1e8] sm:$0xff]
        %v272 = vld [vmem:[%s182 + $0x1f0] sm:$0xff]
        %v273 = vld [vmem:[%s182 + $0x1f8] sm:$0xff]
        %v276 = vunpack.c.l.b16 %v208
        %v277 = vunpack.c.h.b16 %v208
        %v278 = vunpack.c.l.b16 %v209
        %v279 = vunpack.c.h.b16 %v209
        %v280 = vpack.c.b16 %v278, %v276
        %v281 = vpack.c.b16 %v279, %v277
        %v348 = vunpack.c.l.b16 %v210
        %v349 = vunpack.c.h.b16 %v210
        %v350 = vunpack.c.l.b16 %v211
        %v351 = vunpack.c.h.b16 %v211
        %v352 = vunpack.c.l.b16 %v212
        %v353 = vunpack.c.h.b16 %v212
        %v354 = vunpack.c.l.b16 %v213
        %v355 = vunpack.c.h.b16 %v213
        %v356 = vunpack.c.l.b16 %v214
        %v357 = vunpack.c.h.b16 %v214
        %v358 = vunpack.c.l.b16 %v215
        %v359 = vunpack.c.h.b16 %v215
        %v360 = vunpack.c.l.b16 %v216
        %v361 = vunpack.c.h.b16 %v216
        %v362 = vunpack.c.l.b16 %v217
        %v363 = vunpack.c.h.b16 %v217
        %v364 = vunpack.c.l.b16 %v218
        %v365 = vunpack.c.h.b16 %v218
        %v366 = vunpack.c.l.b16 %v219
        %v367 = vunpack.c.h.b16 %v219
        %v368 = vunpack.c.l.b16 %v220
        %v369 = vunpack.c.h.b16 %v220
        %v370 = vunpack.c.l.b16 %v221
        %v371 = vunpack.c.h.b16 %v221
        %v372 = vunpack.c.l.b16 %v222
        %v373 = vunpack.c.h.b16 %v222
        %v374 = vunpack.c.l.b16 %v223
        %v375 = vunpack.c.h.b16 %v223
        %v376 = vunpack.c.l.b16 %v224
        %v377 = vunpack.c.h.b16 %v224
        %v378 = vunpack.c.l.b16 %v225
        %v379 = vunpack.c.h.b16 %v225
        %v380 = vunpack.c.l.b16 %v226
        %v381 = vunpack.c.h.b16 %v226
        %v382 = vunpack.c.l.b16 %v227
        %v383 = vunpack.c.h.b16 %v227
        %v384 = vunpack.c.l.b16 %v228
        %v385 = vunpack.c.h.b16 %v228
        %v386 = vunpack.c.l.b16 %v229
        %v387 = vunpack.c.h.b16 %v229
        %v388 = vunpack.c.l.b16 %v230
        %v389 = vunpack.c.h.b16 %v230
        %v390 = vunpack.c.l.b16 %v231
        %v391 = vunpack.c.h.b16 %v231
        %v392 = vunpack.c.l.b16 %v232
        %v393 = vunpack.c.h.b16 %v232
        %v394 = vunpack.c.l.b16 %v233
        %v395 = vunpack.c.h.b16 %v233
        %v396 = vunpack.c.l.b16 %v234
        %v397 = vunpack.c.h.b16 %v234
        %v398 = vunpack.c.l.b16 %v235
        %v399 = vunpack.c.h.b16 %v235
        %v400 = vunpack.c.l.b16 %v236
        %v401 = vunpack.c.h.b16 %v236
        %v402 = vunpack.c.l.b16 %v237
        %v403 = vunpack.c.h.b16 %v237
        %v404 = vunpack.c.l.b16 %v238
        %v405 = vunpack.c.h.b16 %v238
        %v406 = vunpack.c.l.b16 %v239
        %v407 = vunpack.c.h.b16 %v239
        %v408 = vunpack.c.l.b16 %v240
        %v409 = vunpack.c.h.b16 %v240
        %v410 = vunpack.c.l.b16 %v241
        %v411 = vunpack.c.h.b16 %v241
        %v412 = vunpack.c.l.b16 %v242
        %v413 = vunpack.c.h.b16 %v242
        %v414 = vunpack.c.l.b16 %v243
        %v415 = vunpack.c.h.b16 %v243
        %v416 = vunpack.c.l.b16 %v244
        %v417 = vunpack.c.h.b16 %v244
        %v418 = vunpack.c.l.b16 %v245
        %v419 = vunpack.c.h.b16 %v245
        %v420 = vunpack.c.l.b16 %v246
        %v421 = vunpack.c.h.b16 %v246
        %v422 = vunpack.c.l.b16 %v247
        %v423 = vunpack.c.h.b16 %v247
        %v424 = vunpack.c.l.b16 %v248
        %v425 = vunpack.c.h.b16 %v248
        %v426 = vunpack.c.l.b16 %v249
        %v427 = vunpack.c.h.b16 %v249
        %v428 = vunpack.c.l.b16 %v250
        %v429 = vunpack.c.h.b16 %v250
        %v430 = vunpack.c.l.b16 %v251
        %v431 = vunpack.c.h.b16 %v251
        %v432 = vunpack.c.l.b16 %v252
        %v433 = vunpack.c.h.b16 %v252
        %v434 = vunpack.c.l.b16 %v253
        %v435 = vunpack.c.h.b16 %v253
        %v436 = vunpack.c.l.b16 %v254
        %v437 = vunpack.c.h.b16 %v254
        %v438 = vunpack.c.l.b16 %v255
        %v439 = vunpack.c.h.b16 %v255
        %v440 = vunpack.c.l.b16 %v256
        %v441 = vunpack.c.h.b16 %v256
        %v442 = vunpack.c.l.b16 %v257
        %v443 = vunpack.c.h.b16 %v257
        %v444 = vunpack.c.l.b16 %v258
        %v445 = vunpack.c.h.b16 %v258
        %v446 = vunpack.c.l.b16 %v259
        %v447 = vunpack.c.h.b16 %v259
        %v448 = vunpack.c.l.b16 %v260
        %v449 = vunpack.c.h.b16 %v260
        %v450 = vunpack.c.l.b16 %v261
        %v451 = vunpack.c.h.b16 %v261
        %v452 = vunpack.c.l.b16 %v262
        %v453 = vunpack.c.h.b16 %v262
        %v454 = vunpack.c.l.b16 %v263
        %v455 = vunpack.c.h.b16 %v263
        %v456 = vunpack.c.l.b16 %v264
        %v457 = vunpack.c.h.b16 %v264
        %v458 = vunpack.c.l.b16 %v265
        %v459 = vunpack.c.h.b16 %v265
        %v460 = vunpack.c.l.b16 %v266
        %v461 = vunpack.c.h.b16 %v266
        %v462 = vunpack.c.l.b16 %v267
        %v463 = vunpack.c.h.b16 %v267
        %v464 = vunpack.c.l.b16 %v268
        %v465 = vunpack.c.h.b16 %v268
        %v466 = vunpack.c.l.b16 %v269
        %v467 = vunpack.c.h.b16 %v269
        %v468 = vunpack.c.l.b16 %v270
        %v469 = vunpack.c.h.b16 %v270
        %v470 = vunpack.c.l.b16 %v271
        %v471 = vunpack.c.h.b16 %v271
        %v472 = vunpack.c.l.b16 %v272
        %v473 = vunpack.c.h.b16 %v272
        %v474 = vunpack.c.l.b16 %v273
        %v475 = vunpack.c.h.b16 %v273
        %v476 = vpack.c.b16 %v352, %v348
        %v477 = vpack.c.b16 %v353, %v349
        %v478 = vpack.c.b16 %v354, %v350
        %v479 = vpack.c.b16 %v355, %v351
        %v480 = vpack.c.b16 %v360, %v356
        %v481 = vpack.c.b16 %v361, %v357
        %v482 = vpack.c.b16 %v362, %v358
        %v483 = vpack.c.b16 %v363, %v359
        %v484 = vpack.c.b16 %v368, %v364
        %v485 = vpack.c.b16 %v369, %v365
        %v486 = vpack.c.b16 %v370, %v366
        %v487 = vpack.c.b16 %v371, %v367
        %v488 = vpack.c.b16 %v376, %v372
        %v489 = vpack.c.b16 %v377, %v373
        %v490 = vpack.c.b16 %v378, %v374
        %v491 = vpack.c.b16 %v379, %v375
        %v492 = vpack.c.b16 %v384, %v380
        %v493 = vpack.c.b16 %v385, %v381
        %v494 = vpack.c.b16 %v386, %v382
        %v495 = vpack.c.b16 %v387, %v383
        %v496 = vpack.c.b16 %v392, %v388
        %v497 = vpack.c.b16 %v393, %v389
        %v498 = vpack.c.b16 %v394, %v390
        %v499 = vpack.c.b16 %v395, %v391
        %v500 = vpack.c.b16 %v400, %v396
        %v501 = vpack.c.b16 %v401, %v397
        %v502 = vpack.c.b16 %v402, %v398
        %v503 = vpack.c.b16 %v403, %v399
        %v504 = vpack.c.b16 %v408, %v404
        %v505 = vpack.c.b16 %v409, %v405
        %v506 = vpack.c.b16 %v410, %v406
        %v507 = vpack.c.b16 %v411, %v407
        %v508 = vpack.c.b16 %v416, %v412
        %v509 = vpack.c.b16 %v417, %v413
        %v510 = vpack.c.b16 %v418, %v414
        %v511 = vpack.c.b16 %v419, %v415
        %v512 = vpack.c.b16 %v424, %v420
        %v513 = vpack.c.b16 %v425, %v421
        %v514 = vpack.c.b16 %v426, %v422
        %v515 = vpack.c.b16 %v427, %v423
        %v516 = vpack.c.b16 %v432, %v428
        %v517 = vpack.c.b16 %v433, %v429
        %v518 = vpack.c.b16 %v434, %v430
        %v519 = vpack.c.b16 %v435, %v431
        %v520 = vpack.c.b16 %v440, %v436
        %v521 = vpack.c.b16 %v441, %v437
        %v522 = vpack.c.b16 %v442, %v438
        %v523 = vpack.c.b16 %v443, %v439
        %v524 = vpack.c.b16 %v448, %v444
        %v525 = vpack.c.b16 %v449, %v445
        %v526 = vpack.c.b16 %v450, %v446
        %v527 = vpack.c.b16 %v451, %v447
        %v528 = vpack.c.b16 %v456, %v452
        %v529 = vpack.c.b16 %v457, %v453
        %v530 = vpack.c.b16 %v458, %v454
        %v531 = vpack.c.b16 %v459, %v455
        %v532 = vpack.c.b16 %v464, %v460
        %v533 = vpack.c.b16 %v465, %v461
        %v534 = vpack.c.b16 %v466, %v462
        %v535 = vpack.c.b16 %v467, %v463
        %v536 = vpack.c.b16 %v472, %v468
        %v537 = vpack.c.b16 %v473, %v469
        %v538 = vpack.c.b16 %v474, %v470
        %v539 = vpack.c.b16 %v475, %v471
        %604 = vmatpush.bf16.msra.mxu0 %v504
        %605 = vmatpush.bf16.msra.mxu0 %v500
        %606 = vmatpush.bf16.msra.mxu0 %v496
        %607 = vmatpush.bf16.msra.mxu0 %v492
        %608 = vmatpush.bf16.msra.mxu0 %v488
        %609 = vmatpush.bf16.msra.mxu0 %v484
        %610 = vmatpush.bf16.msra.mxu0 %v480
        %611 = vmatpush.bf16.msra.mxu0 %v476
        %612 = vmatmul.bf16.gmra.mxu0 %v280
        %v613 = vpop.f32.mrf.mxu0
        %v614 = vadd.f32 0.0, %v613
        %v615 = vpop.f32.mrf.mxu0
        %v616 = vadd.f32 0.0, %v615
        %617 = vdwg.mxu0
        %618 = vmatpush.bf16.msra.mxu0 %v536
        %619 = vmatpush.bf16.msra.mxu0 %v532
        %620 = vmatpush.bf16.msra.mxu0 %v528
        %621 = vmatpush.bf16.msra.mxu0 %v524
        %622 = vmatpush.bf16.msra.mxu0 %v520
        %623 = vmatpush.bf16.msra.mxu0 %v516
        %624 = vmatpush.bf16.msra.mxu0 %v512
        %625 = vmatpush.bf16.msra.mxu0 %v508
        %626 = vmatmul.bf16.gmra.mxu0 %v281
        %v627 = vpop.f32.mrf.mxu0
        %v628 = vadd.f32 %v614, %v627
        %v629 = vpop.f32.mrf.mxu0
        %v630 = vadd.f32 %v616, %v629
        %631 = vdwg.mxu0
        %632 = vmatpush.bf16.msra.mxu0 %v505
        %633 = vmatpush.bf16.msra.mxu0 %v501
        %634 = vmatpush.bf16.msra.mxu0 %v497
        %635 = vmatpush.bf16.msra.mxu0 %v493
        %636 = vmatpush.bf16.msra.mxu0 %v489
        %637 = vmatpush.bf16.msra.mxu0 %v485
        %638 = vmatpush.bf16.msra.mxu0 %v481
        %639 = vmatpush.bf16.msra.mxu0 %v477
        %640 = vmatmul.bf16.gmra.mxu0 %v280
        %v641 = vpop.f32.mrf.mxu0
        %v642 = vadd.f32 0.0, %v641
        %v643 = vpop.f32.mrf.mxu0
        %v644 = vadd.f32 0.0, %v643
        %645 = vdwg.mxu0
        %646 = vmatpush.bf16.msra.mxu0 %v537
        %647 = vmatpush.bf16.msra.mxu0 %v533
        %648 = vmatpush.bf16.msra.mxu0 %v529
        %649 = vmatpush.bf16.msra.mxu0 %v525
        %650 = vmatpush.bf16.msra.mxu0 %v521
        %651 = vmatpush.bf16.msra.mxu0 %v517
        %652 = vmatpush.bf16.msra.mxu0 %v513
        %653 = vmatpush.bf16.msra.mxu0 %v509
        %654 = vmatmul.bf16.gmra.mxu0 %v281
        %v655 = vpop.f32.mrf.mxu0
        %v656 = vadd.f32 %v642, %v655
        %v657 = vpop.f32.mrf.mxu0
        %v658 = vadd.f32 %v644, %v657
        %659 = vdwg.mxu0
        %660 = vmatpush.bf16.msra.mxu0 %v506
        %661 = vmatpush.bf16.msra.mxu0 %v502
        %662 = vmatpush.bf16.msra.mxu0 %v498
        %663 = vmatpush.bf16.msra.mxu0 %v494
        %664 = vmatpush.bf16.msra.mxu0 %v490
        %665 = vmatpush.bf16.msra.mxu0 %v486
        %666 = vmatpush.bf16.msra.mxu0 %v482
        %667 = vmatpush.bf16.msra.mxu0 %v478
        %668 = vmatmul.bf16.gmra.mxu0 %v280
        %v669 = vpop.f32.mrf.mxu0
        %v670 = vadd.f32 0.0, %v669
        %v671 = vpop.f32.mrf.mxu0
        %v672 = vadd.f32 0.0, %v671
        %673 = vdwg.mxu0
        %674 = vmatpush.bf16.msra.mxu0 %v538
        %675 = vmatpush.bf16.msra.mxu0 %v534
        %676 = vmatpush.bf16.msra.mxu0 %v530
        %677 = vmatpush.bf16.msra.mxu0 %v526
        %678 = vmatpush.bf16.msra.mxu0 %v522
        %679 = vmatpush.bf16.msra.mxu0 %v518
        %680 = vmatpush.bf16.msra.mxu0 %v514
        %681 = vmatpush.bf16.msra.mxu0 %v510
        %682 = vmatmul.bf16.gmra.mxu0 %v281
        %v683 = vpop.f32.mrf.mxu0
        %v684 = vadd.f32 %v670, %v683
        %v685 = vpop.f32.mrf.mxu0
        %v686 = vadd.f32 %v672, %v685
        %687 = vdwg.mxu0
        %688 = vmatpush.bf16.msra.mxu0 %v507
        %689 = vmatpush.bf16.msra.mxu0 %v503
        %690 = vmatpush.bf16.msra.mxu0 %v499
        %691 = vmatpush.bf16.msra.mxu0 %v495
        %692 = vmatpush.bf16.msra.mxu0 %v491
        %693 = vmatpush.bf16.msra.mxu0 %v487
        %694 = vmatpush.bf16.msra.mxu0 %v483
        %695 = vmatpush.bf16.msra.mxu0 %v479
        %696 = vmatmul.bf16.gmra.mxu0 %v280
        %v697 = vpop.f32.mrf.mxu0
        %v698 = vadd.f32 0.0, %v697
        %v699 = vpop.f32.mrf.mxu0
        %v700 = vadd.f32 0.0, %v699
        %701 = vdwg.mxu0
        %702 = vmatpush.bf16.msra.mxu0 %v539
        %703 = vmatpush.bf16.msra.mxu0 %v535
        %704 = vmatpush.bf16.msra.mxu0 %v531
        %705 = vmatpush.bf16.msra.mxu0 %v527
        %706 = vmatpush.bf16.msra.mxu0 %v523
        %707 = vmatpush.bf16.msra.mxu0 %v519
        %708 = vmatpush.bf16.msra.mxu0 %v515
        %709 = vmatpush.bf16.msra.mxu0 %v511
        %710 = vmatmul.bf16.gmra.mxu0 %v281
        %v711 = vpop.f32.mrf.mxu0
        %v712 = vadd.f32 %v698, %v711
        %v713 = vpop.f32.mrf.mxu0
        %v714 = vadd.f32 %v700, %v713
        %715 = vdwg.mxu0
        %716 = vst [vmem:[%s203] sm:$0xff] %v628
        %717 = vst [vmem:[%s203 + $0x8] sm:$0xff] %v656
        %718 = vst [vmem:[%s203 + $0x10] sm:$0xff] %v684
        %719 = vst [vmem:[%s203 + $0x18] sm:$0xff] %v712
        %720 = vst [vmem:[%s203 + $0x20] sm:$0xff] %v630
        %721 = vst [vmem:[%s203 + $0x28] sm:$0xff] %v658
        %722 = vst [vmem:[%s203 + $0x30] sm:$0xff] %v686
        %723 = vst [vmem:[%s203 + $0x38] sm:$0xff] %v714
        %s724 = sand.u32 %s94, 1
        %s725 = scalar_lea.sflag [#allocation4], %s724
        %s726 = sand.u32 %s94, 1
        %s727 = smul.addr %s726, 64
        %s728 = scalar_lea.vmem [#allocation7], %s727
        // Predicated region
        $region37: #{tpu_custom_call.1} parent=27 // pred_check
          %p729 = pneg %p104
        $region38: #{tpu_custom_call.1} parent=27 // pred_check_branch
          %731 = sbr.rel (%p729) target = $region40
        $region39: #{tpu_custom_call.1} parent=27 // pred_region
          %s732 = smul.u32 2, %s24
          %s733 = smul.u32 4, %s25
          %735 = vsyncadd %s725, 0
          %s736 = smul.addr %s732, 8
          %s737 = sadd.s32 %s733, %s736
          %s738 = smul.addr %s737, 8
          %s739 = scalar_lea.hbm %s2, %s738
          %s740 = sshll.u32 %s728, 4
          %s741 = int_to_ptr.vmem [resolvable:$true] %s740
          %s742 = sshll.u32 %s739, 4
          %s743 = int_to_ptr.hbm [resolvable:$true] %s742
          %748 = dma.vmem_to_hbm [thread:$0]  %s741, 1024, %s743, %s725, 512, 1024, 32
        $region40: #{tpu_custom_call.1} parent=27 // pred_fallthru
          _
      $region28: #{tpu_custom_call.1} parent=5 // pred_fallthru
        _
      %p749 = scmp.le.s32.totalorder 2, %s15
      // Predicated region
      $region41: #{tpu_custom_call.1} parent=5 // pred_check
        %p750 = pneg %p749
      $region42: #{tpu_custom_call.1} parent=5 // pred_check_branch
        %752 = sbr.rel (%p750) target = $region44
      $region43: #{tpu_custom_call.1} parent=5 // pred_region
        %s753 = ssub.s32 %s15, 2
        // Predicated region
        $region45: #{tpu_custom_call.1} parent=43 // pred_check
          %p754 = pneg %p110
        $region46: #{tpu_custom_call.1} parent=43 // pred_check_branch
          %756 = sbr.rel (%p754) target = $region48
        $region47: #{tpu_custom_call.1} parent=43 // pred_region
          %s757 = sand.u32 %s95, 1
          %s758 = scalar_lea.sflag [#allocation4], %s757
          %s759 = sand.u32 %s95, 1
          %s760 = smul.addr %s759, 64
          %s761 = scalar_lea.vmem [#allocation7], %s760
          %763 = dma.done %s758, 1024
        $region48: #{tpu_custom_call.1} parent=43 // pred_fallthru
          _
      $region44: #{tpu_custom_call.1} parent=5 // pred_fallthru
        _
    $region6: #{tpu_custom_call.1} parent=1 // loop_footer
      %s19 = sadd.s32 1, %s15
    $region7: #{tpu_custom_call.1} parent=1 // loop_footer_branch
      %14 = sbr.rel target = $region3
    $region8: #{tpu_custom_call.1} parent=1 // loop_exit
      _
    %764 = vsyncpa [#allocation3], 1
    %s765 = scalar_lea.sflag [#allocation3], 1
    %766 = vsyncpa %s765, 1
    %767 = vsyncpa [#allocation6], 1
    %s768 = scalar_lea.sflag [#allocation6], 1
    %769 = vsyncpa %s768, 1
    %770 = vsyncpa [#allocation4], 1
    %s771 = scalar_lea.sflag [#allocation4], 1
    %772 = vsyncpa %s771, 1

</llo_original>
